<compile_context>
chip_gen: v7x
topology: tpu7x:2x2x1
jax: 0.10.0
libtpu: 0.0.40
codegen_flags: <defaults>
</compile_context>

<pallas_src>
import functools

import jax
import jax.numpy as jnp
from jax.experimental import pallas as pl
from jax.experimental.pallas import tpu as pltpu

MAX_LEN = 320 + 2            # 322, same as the PyTorch module
PADDED_LEN = 384             # 3 * 128 -> lane-dense loads/stores
MAX_BB = 512                 # rows per grid step; keeps nb >= 2 for big batches (v7x)
CLS_ID = 2                   # albert-base-v2 special-token ids
SEP_ID = 3
PAD_ID = 0
VOCAB_SIZE = 30000


def _round_up(x, m):
    return (x + m - 1) // m * m


def _pack_kernel(lens_ref, text_ref, tok_ref, mask_ref):
    """lens_ref : VMEM (BB, 1)   int32 -- per-row #text tokens L (<= 320)
       text_ref : VMEM (BB, 384) int32 -- text ids left-aligned at cols 0..L-1
       tok_ref  : VMEM (BB, 384) int32 -- [CLS] text [SEP] [PAD]...
       mask_ref : VMEM (BB, 384) int8  -- 1 where token != [PAD]"""
    bb = text_ref.shape[0]
    pos = jax.lax.broadcasted_iota(jnp.int32, (bb, PADDED_LEN), 1)
    L1 = lens_ref[...] + 1                       # (BB, 1); lane-broadcasts below

    # Shift text one lane to the right so column 0 is free for [CLS].  The
    # wrap-around of column 383 into column 0 is safe ONLY because pos == 0 is
    # unconditionally overwritten with CLS_ID in the select chain below.
    txt = pltpu.roll(text_ref[...], shift=1, axis=1)

    in_seq = pos <= L1                                            # not-PAD region
    tok = jnp.where(pos == 0, jnp.int32(CLS_ID),
                    jnp.where(pos == L1, jnp.int32(SEP_ID), txt))
    tok_ref[...] = jnp.where(in_seq, tok, jnp.int32(PAD_ID))      # PAD_ID == 0
    mask_ref[...] = in_seq.astype(jnp.int8)


@functools.partial(jax.jit, static_argnames=("crop",))
def process_text_batch(text_ids_mat, lens, crop=True):
    """text_ids_mat: (B, K) int32, K <= 384; row b holds its real subword ids
       at columns 0..lens[b]-1 (rest don't-care / zero).
       lens: (B,) int32, each <= 320 (longer sequences are truncated, matching
       tokenizer-side max-length behavior).
       crop=True  -> (token_ids, attn_mask, seg_ids), each (B, 322) int32.
       crop=False -> row-padded (B_pad, 384) arrays (mask int8); cols 322..383
                     are PAD with mask 0 -- avoids the non-lane-aligned copy."""
    B, K = text_ids_mat.shape
    assert K <= PADDED_LEN
    # BB multiple of 32 -> satisfies int32 (8,128) and int8 (32,128) tile rules.
    BB = min(MAX_BB, _round_up(max(B, 1), 32))
    nb = pl.cdiv(B, BB)
    B_pad = nb * BB

    lens_col = jnp.clip(lens.astype(jnp.int32), 0, MAX_LEN - 2).reshape(B, 1)
    if (B, K) != (B_pad, PADDED_LEN):
        text = jnp.zeros((B_pad, PADDED_LEN), jnp.int32)
        text = text.at[:B, :K].set(text_ids_mat.astype(jnp.int32))
        lens2 = jnp.zeros((B_pad, 1), jnp.int32).at[:B].set(lens_col)
    else:
        text = text_ids_mat.astype(jnp.int32)
        lens2 = lens_col

    grid_spec = pltpu.PrefetchScalarGridSpec(
        num_scalar_prefetch=0,
        grid=(nb,),
        in_specs=[pl.BlockSpec((BB, 1), lambda i: (i, 0)),
                  pl.BlockSpec((BB, PADDED_LEN), lambda i: (i, 0))],
        out_specs=[pl.BlockSpec((BB, PADDED_LEN), lambda i: (i, 0)),
                   pl.BlockSpec((BB, PADDED_LEN), lambda i: (i, 0))],
    )

    tok_full, mask_full = pl.pallas_call(
        _pack_kernel,
        out_shape=(jax.ShapeDtypeStruct((B_pad, PADDED_LEN), jnp.int32),
                   jax.ShapeDtypeStruct((B_pad, PADDED_LEN), jnp.int8)),
        grid_spec=grid_spec,
        compiler_params=pltpu.CompilerParams(
            dimension_semantics=("parallel",)),
    )(lens2, text)

    if crop:
        token_ids = tok_full[:B, :MAX_LEN]
        attn_mask = mask_full[:B, :MAX_LEN].astype(jnp.int32)
        seg_ids = jnp.zeros((B, MAX_LEN), jnp.int32)
    else:
        token_ids = tok_full
        attn_mask = mask_full
        seg_ids = jnp.zeros((B_pad, PADDED_LEN), jnp.int32)
    return token_ids, attn_mask, seg_ids


def process_text(text_ids):
    """Single sequence (mirrors the PyTorch module): text_ids (L,) int32,
    L <= 320.  Returns (token_ids, attn_mask, seg_ids), each (1, 322) int32."""
    L = int(text_ids.shape[0])
    assert L <= MAX_LEN - 2
    mat = jnp.zeros((1, PADDED_LEN), jnp.int32).at[0, :L].set(
        text_ids.astype(jnp.int32))
    lens = jnp.array([L], dtype=jnp.int32)
    return process_text_batch(mat, lens)


if __name__ == "__main__":
    # TODO(synk): AlbertTokenizer.tokenize / convert_tokens_to_ids is pure
    # string (SentencePiece) processing with no Pallas equivalent; we stand in
    # deterministic synthetic subword ids for B=8 "sentences".
    key = jax.random.PRNGKey(0)
    B = 8
    lens_host = [8, 5, 12, 1, 20, 3, 7, 16]
    lens = jnp.array(lens_host, dtype=jnp.int32)
    ids_full = jax.random.randint(
        key, (B, PADDED_LEN), 5, VOCAB_SIZE, dtype=jnp.int32)
    col = jnp.arange(PADDED_LEN)[None, :]
    text_mat = jnp.where(col < lens[:, None], ids_full, 0)   # left-aligned rows

    token_ids, attn_mask, seg_ids = process_text_batch(text_mat, lens)
    jax.block_until_ready((token_ids, attn_mask, seg_ids))

    # Sanity checks against the PyTorch module's semantics.
    assert token_ids.shape == (B, MAX_LEN)
    assert attn_mask.shape == (B, MAX_LEN)
    assert seg_ids.shape == (B, MAX_LEN)
    for b in range(B):
        L = lens_host[b]
        assert int(token_ids[b, 0]) == CLS_ID                           # [CLS]
        assert bool(jnp.all(token_ids[b, 1:L + 1] == text_mat[b, :L]))  # text
        assert int(token_ids[b, L + 1]) == SEP_ID                       # [SEP]
        assert bool(jnp.all(token_ids[b, L + 2:] == PAD_ID))            # [PAD]...
        assert int(attn_mask[b].sum()) == L + 2
        assert bool(jnp.all(attn_mask[b, :L + 2] == 1))
    assert int(seg_ids.sum()) == 0

    # Uncropped fast path (lane-dense 384-wide, int8 mask) is consistent.
    tok_nc, mask_nc, _ = process_text_batch(text_mat, lens, crop=False)
    jax.block_until_ready((tok_nc, mask_nc))
    assert tok_nc.shape[1] == PADDED_LEN
    assert bool(jnp.all(tok_nc[:B, :MAX_LEN] == token_ids))
    assert bool(jnp.all(mask_nc[:B, :MAX_LEN].astype(jnp.int32) == attn_mask))
    assert bool(jnp.all(mask_nc[:, MAX_LEN:] == 0))         # cols 322..383 are PAD

    # Single-sequence path, matching the PyTorch module's (1, 322) outputs.
    tok1, m1, s1 = process_text(text_mat[0, :lens_host[0]])
    jax.block_until_ready((tok1, m1, s1))
    assert tok1.shape == (1, MAX_LEN) and int(tok1[0, 0]) == CLS_ID
    assert bool(jnp.all(tok1 == token_ids[0:1]))
    assert bool(jnp.all(m1 == attn_mask[0:1]))
    assert s1.shape == (1, MAX_LEN) and int(s1.sum()) == 0

    print("KERNEL_OK")
</pallas_src>

<mosaic_0001>
module attributes {stable_mosaic.version = 11 : i64} {
  func.func @_pack_kernel(%arg0: i32, %arg1: memref<32x1xi32, #tpu.memory_space<vmem>>, %arg2: memref<32x384xi32, #tpu.memory_space<vmem>>, %arg3: memref<32x384xi32, #tpu.memory_space<vmem>>, %arg4: memref<32x384xi8, #tpu.memory_space<vmem>>) attributes {dimension_semantics = [#tpu.dimension_semantics<parallel>], iteration_bounds = array<i64: 1>, scalar_prefetch = 0 : i64, scratch_operands = 0 : i64, tpu.core_type = #tpu.core_type<tc>, window_params = [{transform_indices = @transform_0, window_bounds = array<i64: 32, 1>}, {transform_indices = @transform_1, window_bounds = array<i64: 32, 384>}, {transform_indices = @transform_2, window_bounds = array<i64: 32, 384>}, {transform_indices = @transform_3, window_bounds = array<i64: 32, 384>}]} {
    %0 = tpu.iota {dimensions = array<i32: 1>} : vector<32x384xi32>
    %c0 = arith.constant 0 : index
    %c0_0 = arith.constant 0 : index
    %1 = vector.load %arg1[%c0, %c0_0] : memref<32x1xi32, #tpu.memory_space<vmem>>, vector<32x1xi32>
    %c1_i32 = arith.constant 1 : i32
    %2 = vector.broadcast %c1_i32 : i32 to vector<32x1xi32>
    %3 = arith.addi %1, %2 : vector<32x1xi32>
    %c0_1 = arith.constant 0 : index
    %c0_2 = arith.constant 0 : index
    %4 = vector.load %arg2[%c0_1, %c0_2] : memref<32x384xi32, #tpu.memory_space<vmem>>, vector<32x384xi32>
    %c1_i32_3 = arith.constant 1 : i32
    %5 = tpu.dynamic_rotate %4 by %c1_i32_3 dim 1 : vector<32x384xi32>, i32 -> vector<32x384xi32>
    %6 = vector.broadcast %3 : vector<32x1xi32> to vector<32x384xi32>
    %7 = arith.cmpi sle, %0, %6 : vector<32x384xi32>
    %c0_i32 = arith.constant 0 : i32
    %8 = vector.broadcast %c0_i32 : i32 to vector<32x384xi32>
    %9 = arith.cmpi eq, %0, %8 : vector<32x384xi32>
    %10 = vector.broadcast %3 : vector<32x1xi32> to vector<32x384xi32>
    %11 = arith.cmpi eq, %0, %10 : vector<32x384xi32>
    %c3_i32 = arith.constant 3 : i32
    %12 = vector.broadcast %c3_i32 : i32 to vector<32x384xi32>
    %13 = arith.select %11, %12, %5 : vector<32x384xi1>, vector<32x384xi32>
    %c2_i32 = arith.constant 2 : i32
    %14 = vector.broadcast %c2_i32 : i32 to vector<32x384xi32>
    %15 = arith.select %9, %14, %13 : vector<32x384xi1>, vector<32x384xi32>
    %c0_i32_4 = arith.constant 0 : i32
    %16 = vector.broadcast %c0_i32_4 : i32 to vector<32x384xi32>
    %17 = arith.select %7, %15, %16 : vector<32x384xi1>, vector<32x384xi32>
    %c0_5 = arith.constant 0 : index
    %c0_6 = arith.constant 0 : index
    %18 = vector.load %arg3[%c0_5, %c0_6] : memref<32x384xi32, #tpu.memory_space<vmem>>, vector<32x384xi32>
    tpu.vector_store %arg3[%c0_5, %c0_6], %17 {strides = array<i32>} : memref<32x384xi32, #tpu.memory_space<vmem>>, vector<32x384xi32>,
    %19 = arith.extui %7 : vector<32x384xi1> to vector<32x384xi8>
    %c0_7 = arith.constant 0 : index
    %c0_8 = arith.constant 0 : index
    %20 = vector.load %arg4[%c0_7, %c0_8] : memref<32x384xi8, #tpu.memory_space<vmem>>, vector<32x384xi8>
    tpu.vector_store %arg4[%c0_7, %c0_8], %19 {strides = array<i32>} : memref<32x384xi8, #tpu.memory_space<vmem>>, vector<32x384xi8>,
    return
  }
  func.func @transform_0(%arg0: i32) -> (i32, i32) {
    %c0_i32 = arith.constant 0 : i32
    %c0_i32_0 = arith.constant 0 : i32
    return %arg0, %c0_i32 : i32, i32
  }
  func.func @transform_1(%arg0: i32) -> (i32, i32) {
    %c0_i32 = arith.constant 0 : i32
    %c0_i32_0 = arith.constant 0 : i32
    return %arg0, %c0_i32 : i32, i32
  }
  func.func @transform_2(%arg0: i32) -> (i32, i32) {
    %c0_i32 = arith.constant 0 : i32
    %c0_i32_0 = arith.constant 0 : i32
    return %arg0, %c0_i32 : i32, i32
  }
  func.func @transform_3(%arg0: i32) -> (i32, i32) {
    %c0_i32 = arith.constant 0 : i32
    %c0_i32_0 = arith.constant 0 : i32
    return %arg0, %c0_i32 : i32, i32
  }
}

</mosaic_0001>

<llo_original>
// kernel: process_text_batch.1
$region0: #{process_text_batch.1}
  #allocation0 [shape = 'u32[]', space=smem, size = 0x4, offset = 0x4, fixed_abs, tag = 'smem constant byte address 0x4 - core index']
  #allocation1 [shape = 'u32[144,128]{1,0:T(1,128)}', space=vmem, size = 0x12000, scoped, tag = 'internal scratch']
  %s0 = inlined_call_operand.vmem [shape: s32[32,1], index: 0, kind: input, shape index: {}]
  %s1 = inlined_call_operand.vmem [shape: s32[32,384], index: 1, kind: input, shape index: {}]
  %s2 = inlined_call_operand.vmem [shape: s32[32,384], index: 2, kind: output, shape index: {0}]
  %s3 = inlined_call_operand.vmem [shape: s8[32,384], index: 3, kind: output, shape index: {1}]
  %4 = xla_tuple %s2, %s3
  %s5 = sld [smem:[#allocation0]]
  $region26: #{process_text_batch.1} parent=0
    _
  %s7 = ssub.s32 1, %s5
  %s8 = scalar_select 0, %s7, %s5
  // Predicated region
  $region2: #{process_text_batch.1} parent=0 // pred_check
    _
  $region3: #{process_text_batch.1} parent=0 // pred_check_branch
    %10 = sbr.rel (0) target = $region5
  $region4: #{process_text_batch.1} parent=0 // pred_region
    _
  $region5: #{process_text_batch.1} parent=0 // pred_fallthru
    _
  // Predicated region
  $region6: #{process_text_batch.1} parent=0 // pred_check
    _
  $region7: #{process_text_batch.1} parent=0 // pred_check_branch
    %12 = sbr.rel (0) target = $region9
  $region8: #{process_text_batch.1} parent=0 // pred_region
    _
  $region9: #{process_text_batch.1} parent=0 // pred_fallthru
    _
  %v15 = vlaneseq
  %v16 = vand.u32 %v15, 127
  %v17 = vadd.s32 %v16, 128
  %v18 = vadd.s32 %v16, 256
  %v19 = vld [vmem:[%s0] sm:$0xff]
  %v20 = vld [vmem:[%s0 + $0x8] sm:$0xff]
  %v21 = vld [vmem:[%s0 + $0x10] sm:$0xff]
  %v22 = vld [vmem:[%s0 + $0x18] sm:$0xff]
  %v23 = vadd.s32 %v19, 1
  %v24 = vadd.s32 %v20, 1
  %v25 = vadd.s32 %v21, 1
  %v26 = vadd.s32 %v22, 1
  %v27 = vld [vmem:[%s1] sm:$0xff]
  %v28 = vld [vmem:[%s1 + $0x8] sm:$0xff]
  %v29 = vld [vmem:[%s1 + $0x10] sm:$0xff]
  %v30 = vld [vmem:[%s1 + $0x18] sm:$0xff]
  %v31 = vld [vmem:[%s1 + $0x20] sm:$0xff]
  %v32 = vld [vmem:[%s1 + $0x28] sm:$0xff]
  %v33 = vld [vmem:[%s1 + $0x30] sm:$0xff]
  %v34 = vld [vmem:[%s1 + $0x38] sm:$0xff]
  %v35 = vld [vmem:[%s1 + $0x40] sm:$0xff]
  %v36 = vld [vmem:[%s1 + $0x48] sm:$0xff]
  %v37 = vld [vmem:[%s1 + $0x50] sm:$0xff]
  %v38 = vld [vmem:[%s1 + $0x58] sm:$0xff]
  %39 = vrot.lane.b32.xlu0 %v27, 1
  %v40 = vpop.permute.xlu0 %39
  %41 = vrot.lane.b32.xlu0 %v30, 1
  %v42 = vpop.permute.xlu0 %41
  %43 = vrot.lane.b32.xlu0 %v33, 1
  %v44 = vpop.permute.xlu0 %43
  %45 = vrot.lane.b32.xlu0 %v36, 1
  %v46 = vpop.permute.xlu0 %45
  %47 = vrot.lane.b32.xlu0 %v28, 1
  %v48 = vpop.permute.xlu0 %47
  %49 = vrot.lane.b32.xlu0 %v31, 1
  %v50 = vpop.permute.xlu0 %49
  %51 = vrot.lane.b32.xlu0 %v34, 1
  %v52 = vpop.permute.xlu0 %51
  %53 = vrot.lane.b32.xlu0 %v37, 1
  %v54 = vpop.permute.xlu0 %53
  %55 = vrot.lane.b32.xlu0 %v29, 1
  %v56 = vpop.permute.xlu0 %55
  %57 = vrot.lane.b32.xlu0 %v32, 1
  %v58 = vpop.permute.xlu0 %57
  %59 = vrot.lane.b32.xlu0 %v35, 1
  %v60 = vpop.permute.xlu0 %59
  %61 = vrot.lane.b32.xlu0 %v38, 1
  %v62 = vpop.permute.xlu0 %61
  %vm63 = vcmp.lt.s32.totalorder %v16, 1
  %v64 = vsel %vm63, %v48, %v56
  %v65 = vsel %vm63, %v50, %v58
  %v66 = vsel %vm63, %v52, %v60
  %v67 = vsel %vm63, %v54, %v62
  %v68 = vsel %vm63, %v40, %v48
  %v69 = vsel %vm63, %v42, %v50
  %v70 = vsel %vm63, %v44, %v52
  %v71 = vsel %vm63, %v46, %v54
  %v72 = vsel %vm63, %v56, %v40
  %v73 = vsel %vm63, %v58, %v42
  %v74 = vsel %vm63, %v60, %v44
  %v75 = vsel %vm63, %v62, %v46
  %76 = vset.pattern.permute.xlu0 0
  %77 = vperm.xlu0 %76, %v23
  %v78 = vpop.permute.xlu0 %77
  %79 = vset.pattern.permute.xlu0 0
  %80 = vperm.xlu0 %79, %v24
  %v81 = vpop.permute.xlu0 %80
  %82 = vset.pattern.permute.xlu0 0
  %83 = vperm.xlu0 %82, %v25
  %v84 = vpop.permute.xlu0 %83
  %85 = vset.pattern.permute.xlu0 0
  %86 = vperm.xlu0 %85, %v26
  %v87 = vpop.permute.xlu0 %86
  %vm88 = vcmp.le.s32.totalorder %v16, %v78
  %vm89 = vcmp.le.s32.totalorder %v17, %v78
  %vm90 = vcmp.le.s32.totalorder %v18, %v78
  %vm91 = vcmp.le.s32.totalorder %v16, %v81
  %vm92 = vcmp.le.s32.totalorder %v17, %v81
  %vm93 = vcmp.le.s32.totalorder %v18, %v81
  %vm94 = vcmp.le.s32.totalorder %v16, %v84
  %vm95 = vcmp.le.s32.totalorder %v17, %v84
  %vm96 = vcmp.le.s32.totalorder %v18, %v84
  %vm97 = vcmp.le.s32.totalorder %v16, %v87
  %vm98 = vcmp.le.s32.totalorder %v17, %v87
  %vm99 = vcmp.le.s32.totalorder %v18, %v87
  %vm100 = vcmp.eq.s32.totalorder %v16, 0
  %vm101 = vcmp.eq.s32.totalorder %v17, 0
  %vm102 = vcmp.eq.s32.totalorder %v18, 0
  %vm103 = vcmp.eq.s32.totalorder %v16, %v78
  %vm104 = vcmp.eq.s32.totalorder %v17, %v78
  %vm105 = vcmp.eq.s32.totalorder %v18, %v78
  %vm106 = vcmp.eq.s32.totalorder %v16, %v81
  %vm107 = vcmp.eq.s32.totalorder %v17, %v81
  %vm108 = vcmp.eq.s32.totalorder %v18, %v81
  %vm109 = vcmp.eq.s32.totalorder %v16, %v84
  %vm110 = vcmp.eq.s32.totalorder %v17, %v84
  %vm111 = vcmp.eq.s32.totalorder %v18, %v84
  %vm112 = vcmp.eq.s32.totalorder %v16, %v87
  %vm113 = vcmp.eq.s32.totalorder %v17, %v87
  %vm114 = vcmp.eq.s32.totalorder %v18, %v87
  %v115 = vsel %vm103, 3, %v72
  %v116 = vsel %vm104, 3, %v68
  %v117 = vsel %vm105, 3, %v64
  %v118 = vsel %vm106, 3, %v73
  %v119 = vsel %vm107, 3, %v69
  %v120 = vsel %vm108, 3, %v65
  %v121 = vsel %vm109, 3, %v74
  %v122 = vsel %vm110, 3, %v70
  %v123 = vsel %vm111, 3, %v66
  %v124 = vsel %vm112, 3, %v75
  %v125 = vsel %vm113, 3, %v71
  %v126 = vsel %vm114, 3, %v67
  %v127 = vsel %vm100, 2, %v115
  %v128 = vsel %vm101, 2, %v116
  %v129 = vsel %vm102, 2, %v117
  %v130 = vsel %vm100, 2, %v118
  %v131 = vsel %vm101, 2, %v119
  %v132 = vsel %vm102, 2, %v120
  %v133 = vsel %vm100, 2, %v121
  %v134 = vsel %vm101, 2, %v122
  %v135 = vsel %vm102, 2, %v123
  %v136 = vsel %vm100, 2, %v124
  %v137 = vsel %vm101, 2, %v125
  %v138 = vsel %vm102, 2, %v126
  %v139 = vsel %vm88, %v127, 0
  %v140 = vsel %vm89, %v128, 0
  %v141 = vsel %vm90, %v129, 0
  %v142 = vsel %vm91, %v130, 0
  %v143 = vsel %vm92, %v131, 0
  %v144 = vsel %vm93, %v132, 0
  %v145 = vsel %vm94, %v133, 0
  %v146 = vsel %vm95, %v134, 0
  %v147 = vsel %vm96, %v135, 0
  %v148 = vsel %vm97, %v136, 0
  %v149 = vsel %vm98, %v137, 0
  %v150 = vsel %vm99, %v138, 0
  %151 = vst [vmem:[%s2] sm:$0xff] %v139
  %152 = vst [vmem:[%s2 + $0x8] sm:$0xff] %v140
  %153 = vst [vmem:[%s2 + $0x10] sm:$0xff] %v141
  %154 = vst [vmem:[%s2 + $0x18] sm:$0xff] %v142
  %155 = vst [vmem:[%s2 + $0x20] sm:$0xff] %v143
  %156 = vst [vmem:[%s2 + $0x28] sm:$0xff] %v144
  %157 = vst [vmem:[%s2 + $0x30] sm:$0xff] %v145
  %158 = vst [vmem:[%s2 + $0x38] sm:$0xff] %v146
  %159 = vst [vmem:[%s2 + $0x40] sm:$0xff] %v147
  %160 = vst [vmem:[%s2 + $0x48] sm:$0xff] %v148
  %161 = vst [vmem:[%s2 + $0x50] sm:$0xff] %v149
  %162 = vst [vmem:[%s2 + $0x58] sm:$0xff] %v150
  %vm163 = vmpackc.low %vm91, %vm88
  %vm164 = vmpackc.low %vm97, %vm94
  %vm165 = vmpackc.even %vm164, %vm163
  %vm166 = vmpackc.low %vm92, %vm89
  %vm167 = vmpackc.low %vm98, %vm95
  %vm168 = vmpackc.even %vm167, %vm166
  %vm169 = vmpackc.low %vm93, %vm90
  %vm170 = vmpackc.low %vm99, %vm96
  %vm171 = vmpackc.even %vm170, %vm169
  %v172 = vsel %vm165, 16843009, 0
  %v173 = vsel %vm168, 16843009, 0
  %v174 = vsel %vm171, 16843009, 0
  %v175 = vunpack.c.0.s8 %v172
  %v176 = vunpack.c.0.s8 %v173
  %v177 = vunpack.c.0.s8 %v174
  %v178 = vunpack.c.1.s8 %v172
  %v179 = vunpack.c.1.s8 %v173
  %v180 = vunpack.c.1.s8 %v174
  %v181 = vunpack.c.2.s8 %v172
  %v182 = vunpack.c.2.s8 %v173
  %v183 = vunpack.c.2.s8 %v174
  %v184 = vunpack.c.3.s8 %v172
  %v185 = vunpack.c.3.s8 %v173
  %v186 = vunpack.c.3.s8 %v174
  %v187 = vpack.c.b16 %v176, %v175
  %v188 = vpack.c.b16 %v177, %v177
  %v189 = vpack.c.b8 %v188, %v187
  %v190 = vpack.c.b16 %v179, %v178
  %v191 = vpack.c.b16 %v180, %v180
  %v192 = vpack.c.b8 %v191, %v190
  %v193 = vpack.c.b16 %v182, %v181
  %v194 = vpack.c.b16 %v183, %v183
  %v195 = vpack.c.b8 %v194, %v193
  %v196 = vpack.c.b16 %v185, %v184
  %v197 = vpack.c.b16 %v186, %v186
  %v198 = vpack.c.b8 %v197, %v196
  %199 = vst [vmem:[%s3] sm:$0x3f] %v189
  %200 = vst [vmem:[%s3 + $0x6] sm:$0x3f] %v192
  %201 = vst [vmem:[%s3 + $0xc] sm:$0x3f] %v195
  %202 = vst [vmem:[%s3 + $0x12] sm:$0x3f] %v198
  // Predicated region
  $region10: #{process_text_batch.1} parent=0 // pred_check
    _
  $region11: #{process_text_batch.1} parent=0 // pred_check_branch
    %204 = sbr.rel (0) target = $region13
  $region12: #{process_text_batch.1} parent=0 // pred_region
    _
  $region13: #{process_text_batch.1} parent=0 // pred_fallthru
    _
  // Predicated region
  $region14: #{process_text_batch.1} parent=0 // pred_check
    _
  $region15: #{process_text_batch.1} parent=0 // pred_check_branch
    %206 = sbr.rel (0) target = $region17
  $region16: #{process_text_batch.1} parent=0 // pred_region
    _
  $region17: #{process_text_batch.1} parent=0 // pred_fallthru
    _
  // Predicated region
  $region18: #{process_text_batch.1} parent=0 // pred_check
    _
  $region19: #{process_text_batch.1} parent=0 // pred_check_branch
    %208 = sbr.rel (0) target = $region21
  $region20: #{process_text_batch.1} parent=0 // pred_region
    _
  $region21: #{process_text_batch.1} parent=0 // pred_fallthru
    _
  // Predicated region
  $region22: #{process_text_batch.1} parent=0 // pred_check
    _
  $region23: #{process_text_batch.1} parent=0 // pred_check_branch
    %210 = sbr.rel (0) target = $region25
  $region24: #{process_text_batch.1} parent=0 // pred_region
    _
  $region25: #{process_text_batch.1} parent=0 // pred_fallthru
    _

</llo_original>
